<compile_context>
chip_gen: v6e
topology: v6e:2x2x1
jax: 0.10.0
libtpu: 0.0.40
codegen_flags: <defaults>
</compile_context>

<pallas_src>
import functools

import jax
import jax.numpy as jnp
from jax import lax
from jax.experimental import pallas as pl
from jax.experimental.pallas import tpu as pltpu

_COMPUTE_DTYPE = jnp.bfloat16  # MXU operand dtype; accumulation stays f32.


def _critic_kernel(obs_ref, w1_ref, b1_ref, w2_ref, b2_ref, w3_ref, b3_ref,
                   out_ref):
    # obs arrives as f32 straight from HBM; cast to bf16 on the VPU here
    # (free under slack) instead of a separate wrapper-side cast pass.
    obs = obs_ref[...].astype(_COMPUTE_DTYPE)
    # Hidden layer 1: Linear + tanh.  bf16 operands, f32 accumulation/epilogue.
    h1 = jnp.tanh(
        jnp.dot(obs, w1_ref[...], preferred_element_type=jnp.float32)
        + b1_ref[...])
    # Hidden layer 2: Linear + tanh.
    h2 = jnp.tanh(
        jnp.dot(h1.astype(_COMPUTE_DTYPE), w2_ref[...],
                preferred_element_type=jnp.float32)
        + b2_ref[...])
    # Output layer: Linear(h2, 1), Identity activation.  Computed as
    # w3_row @ h2^T so the per-tile result is lane-dense (1, tile) instead of
    # a masked-store (tile, 1) column, and avoids the N=1 MXU matmul.
    v = lax.dot_general(
        w3_ref[...], h2.astype(_COMPUTE_DTYPE),
        dimension_numbers=(((1,), (1,)), ((), ())),
        preferred_element_type=jnp.float32)
    out_ref[...] = (v + b3_ref[0]).astype(out_ref.dtype)


def _call_critic(obs, w1, b1, w2, b2, w3, b3, *, tile):
    """One pallas_call over `obs` rows with batch tile `tile` (tile | rows)."""
    rows, obs_dim = obs.shape
    h1_dim = w1.shape[1]
    h2_dim = w2.shape[1]
    num_tiles = rows // tile
    out = pl.pallas_call(
        _critic_kernel,
        out_shape=jax.ShapeDtypeStruct((1, rows), jnp.float32),
        grid=(num_tiles,),
        in_specs=[
            pl.BlockSpec((tile, obs_dim), lambda i: (i, 0)),    # obs: streams (f32)
            pl.BlockSpec((obs_dim, h1_dim), lambda i: (0, 0)),  # w1: resident
            pl.BlockSpec((1, h1_dim), lambda i: (0, 0)),        # b1: resident
            pl.BlockSpec((h1_dim, h2_dim), lambda i: (0, 0)),   # w2: resident
            pl.BlockSpec((1, h2_dim), lambda i: (0, 0)),        # b2: resident
            pl.BlockSpec((1, h2_dim), lambda i: (0, 0)),        # w3 row: resident
            pl.BlockSpec(memory_space=pltpu.MemorySpace.SMEM),  # b3 scalar
        ],
        out_specs=pl.BlockSpec((1, tile), lambda i: (0, i)),    # lane-dense out
        compiler_params=pltpu.CompilerParams(
            dimension_semantics=("parallel",),
            vmem_limit_bytes=32 * 1024 * 1024),
    )(obs, w1, b1, w2, b2, w3, b3)
    return out[0]


@functools.partial(jax.jit, static_argnames=("tile_b",))
def mlp_critic_forward(obs, w1, b1, w2, b2, w3, b3, *, tile_b=4096):
    """MLP critic forward; returns values of shape [B].  No padding copies."""
    B, _ = obs.shape
    h1_dim = w1.shape[1]
    h2_dim = w2.shape[1]

    obs = obs.astype(jnp.float32)  # no-op when already f32; cast to bf16 in-kernel
    # Weights/biases are tiny (<= 32x32); casting them is negligible traffic.
    w1_c = w1.astype(_COMPUTE_DTYPE)
    w2_c = w2.astype(_COMPUTE_DTYPE)
    w3_c = w3.reshape(1, h2_dim).astype(_COMPUTE_DTYPE)  # row layout for NT matmul
    b1_c = b1.reshape(1, h1_dim).astype(jnp.float32)
    b2_c = b2.reshape(1, h2_dim).astype(jnp.float32)
    b3_c = b3.reshape(1).astype(jnp.float32)
    args = (w1_c, b1_c, w2_c, b2_c, w3_c, b3_c)

    tile_b = max(128, (int(tile_b) // 128) * 128)

    if B <= tile_b:
        # Whole batch in one (or two) full-array tiles: no padding needed.
        if B >= 2048 and B % 256 == 0:
            tile = B // 2  # two tiles -> both v7x TensorCores get work
        else:
            tile = B
        return _call_critic(obs, *args, tile=tile)

    # Main part: whole tile_b tiles; tail rows go through a second small call
    # (block = full tail array), avoiding any jnp.pad copy of obs.
    main_rows = (B // tile_b) * tile_b
    v_main = _call_critic(obs[:main_rows], *args, tile=tile_b)
    if main_rows == B:
        return v_main
    v_tail = _call_critic(obs[main_rows:], *args, tile=B - main_rows)
    return jnp.concatenate([v_main, v_tail], axis=0)


def _init_linear(key, fan_in, fan_out):
    """Deterministic init mimicking torch.nn.Linear: U(-1/sqrt(fan_in), ...)."""
    kw, kb = jax.random.split(key)
    bound = 1.0 / jnp.sqrt(jnp.float32(fan_in))
    # Stored as [in, out] (transposed vs torch's [out, in]) so math is x @ W.
    w = jax.random.uniform(kw, (fan_in, fan_out), jnp.float32, -bound, bound)
    b = jax.random.uniform(kb, (1, fan_out), jnp.float32, -bound, bound)
    return w, b


if __name__ == "__main__":
    # Small shapes consistent with the module: obs_dim=16, hidden_sizes=(32, 32)
    B, obs_dim = 8, 16
    hidden_sizes = (32, 32)

    key = jax.random.PRNGKey(0)
    k_obs, k1, k2, k3 = jax.random.split(key, 4)

    obs = jax.random.normal(k_obs, (B, obs_dim), jnp.float32)
    w1, b1 = _init_linear(k1, obs_dim, hidden_sizes[0])
    w2, b2 = _init_linear(k2, hidden_sizes[0], hidden_sizes[1])
    w3, b3 = _init_linear(k3, hidden_sizes[1], 1)

    def ref_bf16(o):
        bf = _COMPUTE_DTYPE
        h1 = jnp.tanh(jnp.dot(o.astype(bf), w1.astype(bf),
                              preferred_element_type=jnp.float32) + b1)
        h2 = jnp.tanh(jnp.dot(h1.astype(bf), w2.astype(bf),
                              preferred_element_type=jnp.float32) + b2)
        return (jnp.dot(h2.astype(bf), w3.astype(bf),
                        preferred_element_type=jnp.float32) + b3)[:, 0]

    def ref_f32(o):
        return jnp.squeeze(
            jnp.tanh(jnp.tanh(o @ w1 + b1) @ w2 + b2) @ w3 + b3, axis=-1)

    # --- single-tile path (tiny batch) ---
    v = mlp_critic_forward(obs, w1, b1, w2, b2, w3, b3)
    v = jax.block_until_ready(v)
    assert v.shape == (B,)
    assert jnp.allclose(v, ref_bf16(obs), atol=2e-2, rtol=2e-2)
    assert jnp.allclose(v, ref_f32(obs), atol=1e-1, rtol=1e-1)

    # --- multi-tile + tail path (no padding): B=300, tile=128 -> 2 tiles + 44 tail ---
    B2 = 300
    obs2 = jax.random.normal(jax.random.PRNGKey(1), (B2, obs_dim), jnp.float32)
    v2 = mlp_critic_forward(obs2, w1, b1, w2, b2, w3, b3, tile_b=128)
    v2 = jax.block_until_ready(v2)
    assert v2.shape == (B2,)
    assert jnp.allclose(v2, ref_bf16(obs2), atol=2e-2, rtol=2e-2)

    print("KERNEL_OK")
</pallas_src>

<mosaic_0001>
module attributes {stable_mosaic.version = 11 : i64} {
  func.func @_critic_kernel(%arg0: i32, %arg1: memref<8x16xf32, #tpu.memory_space<vmem>>, %arg2: memref<16x32xbf16, #tpu.memory_space<vmem>>, %arg3: memref<1x32xf32, #tpu.memory_space<vmem>>, %arg4: memref<32x32xbf16, #tpu.memory_space<vmem>>, %arg5: memref<1x32xf32, #tpu.memory_space<vmem>>, %arg6: memref<1x32xbf16, #tpu.memory_space<vmem>>, %arg7: memref<1xf32, #tpu.memory_space<smem>>, %arg8: memref<1x8xf32, #tpu.memory_space<vmem>>) attributes {dimension_semantics = [#tpu.dimension_semantics<parallel>], iteration_bounds = array<i64: 1>, scalar_prefetch = 0 : i64, scratch_operands = 0 : i64, tpu.core_type = #tpu.core_type<tc>, window_params = [{transform_indices = @transform_0, window_bounds = array<i64: 8, 16>}, {pipeline_mode = #tpu.pipeline_mode<synchronous>, transform_indices = @transform_1, window_bounds = array<i64: 16, 32>}, {pipeline_mode = #tpu.pipeline_mode<synchronous>, transform_indices = @transform_2, window_bounds = array<i64: 1, 32>}, {pipeline_mode = #tpu.pipeline_mode<synchronous>, transform_indices = @transform_3, window_bounds = array<i64: 32, 32>}, {pipeline_mode = #tpu.pipeline_mode<synchronous>, transform_indices = @transform_4, window_bounds = array<i64: 1, 32>}, {pipeline_mode = #tpu.pipeline_mode<synchronous>, transform_indices = @transform_5, window_bounds = array<i64: 1, 32>}, {transform_indices = @transform_6, window_bounds = array<i64: 1>}, {transform_indices = @transform_7, window_bounds = array<i64: 1, 8>}]} {
    %c0 = arith.constant 0 : index
    %c0_0 = arith.constant 0 : index
    %0 = vector.load %arg1[%c0, %c0_0] : memref<8x16xf32, #tpu.memory_space<vmem>>, vector<8x16xf32>
    %1 = arith.truncf %0 : vector<8x16xf32> to vector<8x16xbf16>
    %c0_1 = arith.constant 0 : index
    %c0_2 = arith.constant 0 : index
    %2 = vector.load %arg2[%c0_1, %c0_2] : memref<16x32xbf16, #tpu.memory_space<vmem>>, vector<16x32xbf16>
    %cst = arith.constant dense<0.000000e+00> : vector<8x32xf32>
    %3 = tpu.matmul %1, %2, %cst {dimension_numbers = #tpu.dot_dimension_numbers<[1], [0], [0], [1], [0, 0, 1, 1], [], []>} : vector<8x16xbf16>, vector<16x32xbf16>, vector<8x32xf32> -> vector<8x32xf32>
    %c0_3 = arith.constant 0 : index
    %c0_4 = arith.constant 0 : index
    %4 = vector.load %arg3[%c0_3, %c0_4] : memref<1x32xf32, #tpu.memory_space<vmem>>, vector<1x32xf32>
    %5 = vector.broadcast %4 : vector<1x32xf32> to vector<8x32xf32>
    %6 = arith.addf %3, %5 : vector<8x32xf32>
    %7 = math.tanh %6 : vector<8x32xf32>
    %8 = arith.truncf %7 : vector<8x32xf32> to vector<8x32xbf16>
    %c0_5 = arith.constant 0 : index
    %c0_6 = arith.constant 0 : index
    %9 = vector.load %arg4[%c0_5, %c0_6] : memref<32x32xbf16, #tpu.memory_space<vmem>>, vector<32x32xbf16>
    %cst_7 = arith.constant dense<0.000000e+00> : vector<8x32xf32>
    %10 = tpu.matmul %8, %9, %cst_7 {dimension_numbers = #tpu.dot_dimension_numbers<[1], [0], [0], [1], [0, 0, 1, 1], [], []>} : vector<8x32xbf16>, vector<32x32xbf16>, vector<8x32xf32> -> vector<8x32xf32>
    %c0_8 = arith.constant 0 : index
    %c0_9 = arith.constant 0 : index
    %11 = vector.load %arg5[%c0_8, %c0_9] : memref<1x32xf32, #tpu.memory_space<vmem>>, vector<1x32xf32>
    %12 = vector.broadcast %11 : vector<1x32xf32> to vector<8x32xf32>
    %13 = arith.addf %10, %12 : vector<8x32xf32>
    %14 = math.tanh %13 : vector<8x32xf32>
    %c0_10 = arith.constant 0 : index
    %c0_11 = arith.constant 0 : index
    %15 = vector.load %arg6[%c0_10, %c0_11] : memref<1x32xbf16, #tpu.memory_space<vmem>>, vector<1x32xbf16>
    %16 = arith.truncf %14 : vector<8x32xf32> to vector<8x32xbf16>
    %cst_12 = arith.constant dense<0.000000e+00> : vector<1x8xf32>
    %17 = tpu.matmul %15, %16, %cst_12 {dimension_numbers = #tpu.dot_dimension_numbers<[1], [1], [0], [0], [0, 0, 1, 0], [], []>} : vector<1x32xbf16>, vector<8x32xbf16>, vector<1x8xf32> -> vector<1x8xf32>
    %c0_13 = arith.constant 0 : index
    %18 = memref.load %arg7[%c0_13] : memref<1xf32, #tpu.memory_space<smem>>
    %19 = vector.broadcast %18 : f32 to vector<1x8xf32>
    %20 = arith.addf %17, %19 : vector<1x8xf32>
    %c0_14 = arith.constant 0 : index
    %c0_15 = arith.constant 0 : index
    %21 = vector.load %arg8[%c0_14, %c0_15] : memref<1x8xf32, #tpu.memory_space<vmem>>, vector<1x8xf32>
    tpu.vector_store %arg8[%c0_14, %c0_15], %20 {strides = array<i32>} : memref<1x8xf32, #tpu.memory_space<vmem>>, vector<1x8xf32>,
    return
  }
  func.func @transform_0(%arg0: i32) -> (i32, i32) {
    %c0_i32 = arith.constant 0 : i32
    %c0_i32_0 = arith.constant 0 : i32
    return %arg0, %c0_i32 : i32, i32
  }
  func.func @transform_1(%arg0: i32) -> (i32, i32) {
    %c0_i32 = arith.constant 0 : i32
    %c0_i32_0 = arith.constant 0 : i32
    %c0_i32_1 = arith.constant 0 : i32
    return %c0_i32, %c0_i32_0 : i32, i32
  }
  func.func @transform_2(%arg0: i32) -> (i32, i32) {
    %c0_i32 = arith.constant 0 : i32
    %c0_i32_0 = arith.constant 0 : i32
    %c0_i32_1 = arith.constant 0 : i32
    return %c0_i32, %c0_i32_0 : i32, i32
  }
  func.func @transform_3(%arg0: i32) -> (i32, i32) {
    %c0_i32 = arith.constant 0 : i32
    %c0_i32_0 = arith.constant 0 : i32
    %c0_i32_1 = arith.constant 0 : i32
    return %c0_i32, %c0_i32_0 : i32, i32
  }
  func.func @transform_4(%arg0: i32) -> (i32, i32) {
    %c0_i32 = arith.constant 0 : i32
    %c0_i32_0 = arith.constant 0 : i32
    %c0_i32_1 = arith.constant 0 : i32
    return %c0_i32, %c0_i32_0 : i32, i32
  }
  func.func @transform_5(%arg0: i32) -> (i32, i32) {
    %c0_i32 = arith.constant 0 : i32
    %c0_i32_0 = arith.constant 0 : i32
    %c0_i32_1 = arith.constant 0 : i32
    return %c0_i32, %c0_i32_0 : i32, i32
  }
  func.func @transform_6(%arg0: i32) -> i32 {
    %c0_i32 = arith.constant 0 : i32
    %c0_i32_0 = arith.constant 0 : i32
    return %c0_i32 : i32
  }
  func.func @transform_7(%arg0: i32) -> (i32, i32) {
    %c0_i32 = arith.constant 0 : i32
    %c0_i32_0 = arith.constant 0 : i32
    return %c0_i32, %arg0 : i32, i32
  }
}

</mosaic_0001>

<llo_original>
// kernel: mlp_critic_forward.1
$region0: #{mlp_critic_forward.1}
  #allocation0 [shape = 'u32[]', space=smem, size = 0x4, offset = 0x4, fixed_abs, tag = 'smem constant byte address 0x4 - core index']
  #allocation1 [shape = 'u32[144,128]{1,0:T(1,128)}', space=vmem, size = 0x12000, scoped, tag = 'internal scratch']
  #allocation2 [shape = 'f32[1]{0:T(128)S(6)}', space=smem, size = 0x200, scoped, tag = 'scoped memory for mlp_critic_forward.1']
  %s0 = inlined_call_operand.vmem [shape: f32[8,16], index: 0, kind: input, shape index: {}]
  %s1 = inlined_call_operand.vmem [shape: bf16[16,32], index: 1, kind: input, shape index: {}]
  %s2 = inlined_call_operand.vmem [shape: f32[1,32], index: 2, kind: input, shape index: {}]
  %s3 = inlined_call_operand.vmem [shape: bf16[32,32], index: 3, kind: input, shape index: {}]
  %s4 = inlined_call_operand.vmem [shape: f32[1,32], index: 4, kind: input, shape index: {}]
  %s5 = inlined_call_operand.vmem [shape: bf16[1,32], index: 5, kind: input, shape index: {}]
  %s6 = inlined_call_operand.<no memory space> [shape: f32[1], index: 6, kind: input, shape index: {}]
  %s7 = inlined_call_operand.hbm [shape: f32[1,8], index: 7, kind: output, shape index: {}]
  %s8 = sld [smem:[#allocation0]]
  $region38: #{mlp_critic_forward.1} parent=0
    _
  %s10 = ssub.s32 1, %s8
  %s11 = scalar_select 0, %s10, %s8
  %12 = sst [smem:[#allocation2]] %s6
  $region1: #{mlp_critic_forward.1} parent=0
    #allocation3 [shape = 'u8[512]{0}', space=vmem, size = 0x400, scoped, tag = 'output window, operand 0, single buffered']
    #allocation4 [shape = 's32[1]{0}', space=sflag, size = 0x4, scoped, tag = 'scoped memory for mlp_critic_forward.1']
    %13 = vsyncpa [#allocation4], 0
    // Predicated region
    $region2: #{mlp_critic_forward.1} parent=1 // pred_check
      _
    $region3: #{mlp_critic_forward.1} parent=1 // pred_check_branch
      %15 = sbr.rel (0) target = $region5
    $region4: #{mlp_critic_forward.1} parent=1 // pred_region
      _
    $region5: #{mlp_critic_forward.1} parent=1 // pred_fallthru
      _
    // Predicated region
    $region6: #{mlp_critic_forward.1} parent=1 // pred_check
      _
    $region7: #{mlp_critic_forward.1} parent=1 // pred_check_branch
      %17 = sbr.rel (0) target = $region9
    $region8: #{mlp_critic_forward.1} parent=1 // pred_region
      _
    $region9: #{mlp_critic_forward.1} parent=1 // pred_fallthru
      _
    // Predicated region
    $region10: #{mlp_critic_forward.1} parent=1 // pred_check
      _
    $region11: #{mlp_critic_forward.1} parent=1 // pred_check_branch
      %19 = sbr.rel (0) target = $region13
    $region12: #{mlp_critic_forward.1} parent=1 // pred_region
      _
    $region13: #{mlp_critic_forward.1} parent=1 // pred_fallthru
      _
    // Predicated region
    $region14: #{mlp_critic_forward.1} parent=1 // pred_check
      _
    $region15: #{mlp_critic_forward.1} parent=1 // pred_check_branch
      %21 = sbr.rel (0) target = $region17
    $region16: #{mlp_critic_forward.1} parent=1 // pred_region
      _
    $region17: #{mlp_critic_forward.1} parent=1 // pred_fallthru
      _
    // Predicated region
    $region18: #{mlp_critic_forward.1} parent=1 // pred_check
      _
    $region19: #{mlp_critic_forward.1} parent=1 // pred_check_branch
      %23 = sbr.rel (0) target = $region21
    $region20: #{mlp_critic_forward.1} parent=1 // pred_region
      _
    $region21: #{mlp_critic_forward.1} parent=1 // pred_fallthru
      _
    // Predicated region
    $region22: #{mlp_critic_forward.1} parent=1 // pred_check
      _
    $region23: #{mlp_critic_forward.1} parent=1 // pred_check_branch
      %25 = sbr.rel (0) target = $region25
    $region24: #{mlp_critic_forward.1} parent=1 // pred_region
      _
    $region25: #{mlp_critic_forward.1} parent=1 // pred_fallthru
      _
    // Predicated region
    $region26: #{mlp_critic_forward.1} parent=1 // pred_check
      _
    $region27: #{mlp_critic_forward.1} parent=1 // pred_check_branch
      %27 = sbr.rel (0) target = $region29
    $region28: #{mlp_critic_forward.1} parent=1 // pred_region
      _
    $region29: #{mlp_critic_forward.1} parent=1 // pred_fallthru
      _
    %v29 = vld [vmem:[%s0] sm:$0xff]
    %v30 = vpack.c.bf16 %v29, %v29
    %v31 = vld [vmem:[%s1] sm:$0xf]
    %v32 = vld [vmem:[%s1 + $0x4] sm:$0xf]
    %v33 = vld [vmem:[%s2] sm:$0x1]
    %v35 = vlaneseq
    %v36 = vshrl.u32 %v35, 7
    %v37 = vsub.s32 0, %v36
    %v38 = vrot.slane %v33, %v37
    %v42 = vunpack.c.l.b16 %v31
    %v43 = vunpack.c.l.b16 %v32
    %v44 = vpack.c.b16 %v43, %v42
    %vm46 = vcmask 130048
    %v48 = vsel %vm46, %v30, 0
    %50 = vmatprep.subr.bf16.mxu0 0
    %51 = vmatpush1.bf16.msra.mxu0 0
    %52 = vmatprep.subr.bf16.mxu0 0
    %53 = vmatpush1.bf16.msra.mxu0 0
    %54 = vmatprep.subr.bf16.mxu0 0
    %55 = vmatpush1.bf16.msra.mxu0 0
    %56 = vmatprep.subr.bf16.mxu0 0
    %57 = vmatpush1.bf16.msra.mxu0 0
    %58 = vmatprep.subr.bf16.mxu0 0
    %59 = vmatpush1.bf16.msra.mxu0 0
    %60 = vmatprep.subr.bf16.mxu0 0
    %61 = vmatpush1.bf16.msra.mxu0 0
    %62 = vmatprep.subr.bf16.mxu0 0
    %63 = vmatpush1.bf16.msra.mxu0 0
    %64 = vmatprep.subr.bf16.mxu0 0
    %65 = vmatpush1.bf16.msra.mxu0 %v44
    %66 = vmatprep.subr.bf16.mxu0 0
    %67 = vmatpush2.bf16.msra.mxu0 0
    %68 = vmatprep.subr.bf16.mxu0 0
    %69 = vmatpush2.bf16.msra.mxu0 0
    %70 = vmatprep.subr.bf16.mxu0 0
    %71 = vmatpush2.bf16.msra.mxu0 0
    %72 = vmatprep.subr.bf16.mxu0 0
    %73 = vmatpush2.bf16.msra.mxu0 0
    %74 = vmatprep.subr.bf16.mxu0 0
    %75 = vmatpush2.bf16.msra.mxu0 0
    %76 = vmatprep.subr.bf16.mxu0 0
    %77 = vmatpush2.bf16.msra.mxu0 0
    %78 = vmatprep.subr.bf16.mxu0 0
    %79 = vmatpush2.bf16.msra.mxu0 0
    %80 = vmatprep.subr.bf16.mxu0 0
    %81 = vmatpush2.bf16.msra.mxu0 0
    %82 = vmatprep.mubr.bf16.mxu0 0
    %83 = vmatmul.mubr.bf16.gmra.mxu0 %v48
    %v84 = vpop.f32.mrf.mxu0
    %v85 = vadd.f32 %v38, %v84
    %v86 = vpop.f32.mrf.mxu0
    %v87 = vpop.f32.mrf.mxu0
    %v88 = vpop.f32.mrf.mxu0
    %89 = vdwg.mxu0
    %v90 = vtanh.pop %v85
    %v91 = vpack.c.bf16 %v90, %v90
    %v92 = vld [vmem:[%s3] sm:$0xf]
    %v93 = vld [vmem:[%s3 + $0x4] sm:$0xf]
    %v94 = vld [vmem:[%s3 + $0x8] sm:$0xf]
    %v95 = vld [vmem:[%s3 + $0xc] sm:$0xf]
    %v96 = vld [vmem:[%s4] sm:$0x1]
    %v98 = vlaneseq
    %v99 = vshrl.u32 %v98, 7
    %v100 = vsub.s32 0, %v99
    %v101 = vrot.slane %v96, %v100
    %v107 = vunpack.c.l.b16 %v92
    %v108 = vunpack.c.l.b16 %v93
    %v109 = vunpack.c.l.b16 %v94
    %v110 = vunpack.c.l.b16 %v95
    %v111 = vpack.c.b16 %v108, %v107
    %v112 = vpack.c.b16 %v110, %v109
    %vm115 = vcmask 261120
    %v117 = vsel %vm115, %v91, 0
    %119 = vmatprep.subr.bf16.mxu0 0
    %120 = vmatpush1.bf16.msra.mxu0 0
    %121 = vmatprep.subr.bf16.mxu0 0
    %122 = vmatpush1.bf16.msra.mxu0 0
    %123 = vmatprep.subr.bf16.mxu0 0
    %124 = vmatpush1.bf16.msra.mxu0 0
    %125 = vmatprep.subr.bf16.mxu0 0
    %126 = vmatpush1.bf16.msra.mxu0 0
    %127 = vmatprep.subr.bf16.mxu0 0
    %128 = vmatpush1.bf16.msra.mxu0 0
    %129 = vmatprep.subr.bf16.mxu0 0
    %130 = vmatpush1.bf16.msra.mxu0 0
    %131 = vmatprep.subr.bf16.mxu0 0
    %132 = vmatpush1.bf16.msra.mxu0 %v112
    %133 = vmatprep.subr.bf16.mxu0 0
    %134 = vmatpush1.bf16.msra.mxu0 %v111
    %135 = vmatprep.subr.bf16.mxu0 0
    %136 = vmatpush2.bf16.msra.mxu0 0
    %137 = vmatprep.subr.bf16.mxu0 0
    %138 = vmatpush2.bf16.msra.mxu0 0
    %139 = vmatprep.subr.bf16.mxu0 0
    %140 = vmatpush2.bf16.msra.mxu0 0
    %141 = vmatprep.subr.bf16.mxu0 0
    %142 = vmatpush2.bf16.msra.mxu0 0
    %143 = vmatprep.subr.bf16.mxu0 0
    %144 = vmatpush2.bf16.msra.mxu0 0
    %145 = vmatprep.subr.bf16.mxu0 0
    %146 = vmatpush2.bf16.msra.mxu0 0
    %147 = vmatprep.subr.bf16.mxu0 0
    %148 = vmatpush2.bf16.msra.mxu0 0
    %149 = vmatprep.subr.bf16.mxu0 0
    %150 = vmatpush2.bf16.msra.mxu0 0
    %151 = vmatprep.mubr.bf16.mxu0 0
    %152 = vmatmul.mubr.bf16.gmra.mxu0 %v117
    %v153 = vpop.f32.mrf.mxu0
    %v154 = vadd.f32 %v101, %v153
    %v155 = vpop.f32.mrf.mxu0
    %v156 = vpop.f32.mrf.mxu0
    %v157 = vpop.f32.mrf.mxu0
    %158 = vdwg.mxu0
    %v159 = vtanh.pop %v154
    %v160 = vld [vmem:[%s5] sm:$0x1]
    %v161 = vpack.c.bf16 %v159, %v159
    %s162 = sld [smem:[#allocation2]]
    %v163 = vstv %s162
    %v165 = vsel %vm115, %v160, 0
    %v168 = vsel %vm115, %v161, 0
    %170 = vmatprep.subr.bf16.mxu0 0
    %171 = vmatpush1.bf16.xpose.msra.mxu0 0
    %172 = vmatprep.subr.bf16.mxu0 0
    %173 = vmatpush1.bf16.xpose.msra.mxu0 0
    %174 = vmatprep.subr.bf16.mxu0 0
    %175 = vmatpush1.bf16.xpose.msra.mxu0 0
    %176 = vmatprep.subr.bf16.mxu0 0
    %177 = vmatpush1.bf16.xpose.msra.mxu0 0
    %178 = vmatprep.subr.bf16.mxu0 0
    %179 = vmatpush1.bf16.xpose.msra.mxu0 0
    %180 = vmatprep.subr.bf16.mxu0 0
    %181 = vmatpush1.bf16.xpose.msra.mxu0 0
    %182 = vmatprep.subr.bf16.mxu0 0
    %183 = vmatpush1.bf16.xpose.msra.mxu0 0
    %184 = vmatprep.subr.bf16.mxu0 0
    %185 = vmatpush1.bf16.xpose.msra.mxu0 %v168
    %186 = vmatprep.subr.bf16.mxu0 0
    %187 = vmatpush2.bf16.xpose.msra.mxu0 0
    %188 = vmatprep.subr.bf16.mxu0 0
    %189 = vmatpush2.bf16.xpose.msra.mxu0 0
    %190 = vmatprep.subr.bf16.mxu0 0
    %191 = vmatpush2.bf16.xpose.msra.mxu0 0
    %192 = vmatprep.subr.bf16.mxu0 0
    %193 = vmatpush2.bf16.xpose.msra.mxu0 0
    %194 = vmatprep.subr.bf16.mxu0 0
    %195 = vmatpush2.bf16.xpose.msra.mxu0 0
    %196 = vmatprep.subr.bf16.mxu0 0
    %197 = vmatpush2.bf16.xpose.msra.mxu0 0
    %198 = vmatprep.subr.bf16.mxu0 0
    %199 = vmatpush2.bf16.xpose.msra.mxu0 0
    %200 = vmatprep.subr.bf16.mxu0 0
    %201 = vmatpush2.bf16.xpose.msra.mxu0 0
    %202 = vmatprep.mubr.bf16.mxu0 0
    %203 = vmatmul.mubr.bf16.gmra.mxu0 %v165
    %v204 = vpop.f32.mrf.mxu0
    %v205 = vadd.f32 %v163, %v204
    %v206 = vpop.f32.mrf.mxu0
    %v207 = vpop.f32.mrf.mxu0
    %v208 = vpop.f32.mrf.mxu0
    %209 = vdwg.mxu0
    %vm210 = vcmask 57344
    %211 = vst.msk [vmem:[#allocation3] sm:$0x1] %vm210, %v205
    // Predicated region
    $region30: #{mlp_critic_forward.1} parent=1 // pred_check
      _
    $region31: #{mlp_critic_forward.1} parent=1 // pred_check_branch
      %213 = sbr.rel (0) target = $region33
    $region32: #{mlp_critic_forward.1} parent=1 // pred_region
      %s215 = ssub.s32 16, 16
      %216 = vsyncadd [#allocation4], %s215
      %s218 = sshll.u32 [#allocation3], 4
      %s219 = int_to_ptr.vmem [resolvable:$true] %s218
      %221 = dma.vmem_to_hbm [thread:$0]  %s219, 16, %s7, [#allocation4]
    $region33: #{mlp_critic_forward.1} parent=1 // pred_fallthru
      _
    // Predicated region
    $region34: #{mlp_critic_forward.1} parent=1 // pred_check
      _
    $region35: #{mlp_critic_forward.1} parent=1 // pred_check_branch
      %223 = sbr.rel (0) target = $region37
    $region36: #{mlp_critic_forward.1} parent=1 // pred_region
      %224 = dma.done [#allocation4], 16
    $region37: #{mlp_critic_forward.1} parent=1 // pred_fallthru
      _
    %225 = vsyncpa [#allocation4], 1

</llo_original>
